<compile_context>
chip_gen: v6e
topology: v6e:2x2x1
jax: 0.10.0
libtpu: 0.0.40
codegen_flags: <defaults>
</compile_context>

<pallas_src>
import functools
import math

import jax
import jax.numpy as jnp
from jax import lax
from jax.experimental import pallas as pl
from jax.experimental.pallas import tpu as pltpu

NUM_HEAD = 4      # multi-head attention heads (num_feature must be divisible by this)
HEAD_PAD = 128    # lane-dense width of the fused cls/loc/ctr head output


def _round_up(n, m):
    return ((n + m - 1) // m) * m


def _vmem_limit(nbytes):
    return int(min(100 * (1 << 20), max(32 * (1 << 20), nbytes)))


def _layer_norm(x, gamma, beta, eps=1e-5):
    mu = jnp.mean(x, axis=-1, keepdims=True)
    var = jnp.mean((x - mu) ** 2, axis=-1, keepdims=True)
    return (x - mu) * lax.rsqrt(var + eps) * gamma + beta


# --------------------------------------------------------------------------------------
# Pass 1: fused QKV projection   qkv = x @ [Wq*inv_sqrt_dk | Wk | Wv], head-major outputs
# --------------------------------------------------------------------------------------
def qkv_proj_kernel(x_ref, wqkv_ref, q_ref, k_ref, v_ref):
    f = x_ref.shape[-1]
    d_k = f // NUM_HEAD
    qkv = jnp.dot(x_ref[...], wqkv_ref[...], preferred_element_type=jnp.float32)
    # Head-major outputs: the lane-slice relayout (when d_k % 128 != 0) happens once
    # per sequence tile here instead of per kv step in the attention kernel.
    for h in range(NUM_HEAD):
        lo = h * d_k
        q_ref[h] = qkv[:, lo:lo + d_k].astype(q_ref.dtype)
        k_ref[h] = qkv[:, f + lo:f + lo + d_k].astype(k_ref.dtype)
        v_ref[h] = qkv[:, 2 * f + lo:2 * f + lo + d_k].astype(v_ref.dtype)


# --------------------------------------------------------------------------------------
# Pass 2: flash attention (resident KV) + residual + LN + fc1 + fused prediction heads
# --------------------------------------------------------------------------------------
def dsnet_af_attn_kernel(q_ref,                      # (NUM_HEAD, TILE_Q, d_k) bf16
                         k_ref, v_ref,               # (NUM_HEAD, S_pad, d_k) bf16, resident
                         x_ref,                      # (TILE_Q, F)  bf16, residual input
                         wfc_ref,                    # (F, F) bf16   MultiHeadAttention.fc
                         ln1_g_ref, ln1_b_ref,       # (1, F) f32
                         fc1_w_ref, fc1_b_ref,       # (F, H) bf16, (1, H) f32
                         ln2_g_ref, ln2_b_ref,       # (1, H) f32
                         wh_ref, bh_ref,             # (H, 128) bf16, (1, 128) f32 fused head
                         out_ref,                    # (TILE_Q, 128) f32 lane-dense output
                         *, seq_len, kv_chunk):
    tq = q_ref.shape[1]
    d_k = q_ref.shape[2]
    s_pad = k_ref.shape[1]
    num_chunks = s_pad // kv_chunk
    need_mask = s_pad != seq_len

    head_outs = []
    for h in range(NUM_HEAD):                        # static, unrolled over heads
        qh = q_ref[h]                                # (TILE_Q, d_k) bf16 (leading-axis index)

        def chunk_body(c, carry, h=h, qh=qh):
            m, l, acc = carry
            start = pl.multiple_of(c * kv_chunk, kv_chunk)
            kh = k_ref[h, pl.ds(start, kv_chunk), :]       # (KC, d_k) from resident K
            vh = v_ref[h, pl.ds(start, kv_chunk), :]       # (KC, d_k) from resident V
            # q . k^T via contracting dims (1, 1); 1/sqrt(d_k) already folded into Wq.
            s = lax.dot_general(qh, kh, (((1,), (1,)), ((), ())),
                                preferred_element_type=jnp.float32)
            if need_mask:                                  # mask padded key rows
                col = start + lax.broadcasted_iota(jnp.int32, s.shape, 1)
                s = jnp.where(col < seq_len, s, -1e30)
            m_new = jnp.maximum(m, jnp.max(s, axis=-1, keepdims=True))
            alpha = jnp.exp(m - m_new)
            p = jnp.exp(s - m_new)
            l_new = alpha * l + jnp.sum(p, axis=-1, keepdims=True)
            acc_new = alpha * acc + jnp.dot(p.astype(vh.dtype), vh,
                                            preferred_element_type=jnp.float32)
            return m_new, l_new, acc_new

        init = (jnp.full((tq, 1), -1e30, jnp.float32),     # running max
                jnp.zeros((tq, 1), jnp.float32),           # running denom
                jnp.zeros((tq, d_k), jnp.float32))         # running numerator
        m, l, acc = lax.fori_loop(0, num_chunks, chunk_body, init,
                                  unroll=num_chunks <= 4)
        inv_l = pl.reciprocal(l, approx=True)              # EUP slot
        head_outs.append((acc * inv_l).astype(wfc_ref.dtype))

    # concat heads once, then one full-K matmul with fc (replaces 4 skinny matmuls)
    attn = jnp.concatenate(head_outs, axis=-1)              # (TILE_Q, F) bf16
    y = jnp.dot(attn, wfc_ref[...], preferred_element_type=jnp.float32)

    # residual + LayerNorm (f32 statistics)
    out = _layer_norm(y + x_ref[...].astype(jnp.float32), ln1_g_ref[...], ln1_b_ref[...])

    # fc1: Linear -> ReLU -> (Dropout = identity) -> LayerNorm
    h1 = jnp.dot(out.astype(fc1_w_ref.dtype), fc1_w_ref[...],
                 preferred_element_type=jnp.float32) + fc1_b_ref[...]
    h1 = jnp.maximum(h1, 0.0)
    h1 = _layer_norm(h1, ln2_g_ref[...], ln2_b_ref[...])

    # fused cls/loc/ctr heads: one (H, 128) matmul, lane-dense store.
    # Columns 0=cls(sigmoid), 1:3=loc(exp), 3=ctr(sigmoid); 4..127 are padding garbage.
    raw = jnp.dot(h1.astype(wh_ref.dtype), wh_ref[...],
                  preferred_element_type=jnp.float32) + bh_ref[...]
    col = lax.broadcasted_iota(jnp.int32, raw.shape, 1)
    is_exp = jnp.logical_and(col >= 1, col <= 2)
    sig = 1.0 / (1.0 + jnp.exp(-raw))
    out_ref[...] = jnp.where(is_exp, jnp.exp(raw), sig)


# --------------------------------------------------------------------------------------
# Parameter construction / fusion
# --------------------------------------------------------------------------------------
def init_params(key, num_feature, num_hidden):
    ks = jax.random.split(key, 10)

    def lin_w(k, fan_in, fan_out):
        bound = 1.0 / math.sqrt(fan_in)
        return jax.random.uniform(k, (fan_in, fan_out), jnp.float32, -bound, bound)

    F, H = num_feature, num_hidden
    return dict(
        wq=lin_w(ks[0], F, F), wk=lin_w(ks[1], F, F), wv=lin_w(ks[2], F, F),
        wfc=lin_w(ks[3], F, F),
        ln1_g=jnp.ones((1, F), jnp.float32), ln1_b=jnp.zeros((1, F), jnp.float32),
        fc1_w=lin_w(ks[4], F, H),
        fc1_b=jax.random.uniform(ks[5], (1, H), jnp.float32,
                                 -1.0 / math.sqrt(F), 1.0 / math.sqrt(F)),
        ln2_g=jnp.ones((1, H), jnp.float32), ln2_b=jnp.zeros((1, H), jnp.float32),
        wcls=lin_w(ks[6], H, 1), bcls=jnp.zeros((1, 1), jnp.float32),
        wloc=lin_w(ks[7], H, 2), bloc=jnp.zeros((1, 2), jnp.float32),
        wctr=lin_w(ks[8], H, 1), bctr=jnp.zeros((1, 1), jnp.float32),
    )


def fuse_params(p):
    """QKV concat (1/sqrt(d_k) folded into Wq), fused lane-dense (H,128) head, bf16 cast."""
    bf = jnp.bfloat16
    F = p["wq"].shape[0]
    H = p["fc1_w"].shape[1]
    d_k = F // NUM_HEAD
    wq_scaled = p["wq"] * (1.0 / math.sqrt(d_k))     # fold attention scale into Wq

    w_heads = jnp.zeros((H, HEAD_PAD), jnp.float32)
    w_heads = w_heads.at[:, 0:1].set(p["wcls"])
    w_heads = w_heads.at[:, 1:3].set(p["wloc"])
    w_heads = w_heads.at[:, 3:4].set(p["wctr"])
    b_heads = jnp.zeros((1, HEAD_PAD), jnp.float32)
    b_heads = b_heads.at[:, 0:1].set(p["bcls"])
    b_heads = b_heads.at[:, 1:3].set(p["bloc"])
    b_heads = b_heads.at[:, 3:4].set(p["bctr"])
    return dict(
        wqkv=jnp.concatenate([wq_scaled, p["wk"], p["wv"]], axis=1).astype(bf),  # (F, 3F)
        wfc=p["wfc"].astype(bf),
        ln1_g=p["ln1_g"], ln1_b=p["ln1_b"],
        fc1_w=p["fc1_w"].astype(bf), fc1_b=p["fc1_b"],
        ln2_g=p["ln2_g"], ln2_b=p["ln2_b"],
        w_heads=w_heads.astype(bf), b_heads=b_heads,
    )


# --------------------------------------------------------------------------------------
# Wrapper
# --------------------------------------------------------------------------------------
def dsnet_af_forward(x, fused):
    """x: (1, S, F) f32 -> (pred_cls (S,), pred_loc (S,2), pred_ctr (S,))."""
    _, S, F = x.shape
    H = fused["fc1_w"].shape[1]
    assert F % NUM_HEAD == 0, "num_feature must be divisible by NUM_HEAD"
    d_k = F // NUM_HEAD
    bf = jnp.bfloat16

    # ---- pad S to a q-tile multiple (padded keys masked in-kernel, rows sliced off) ----
    tile_q = 256 if S >= 256 else _round_up(S, 8)
    S_pad = _round_up(S, tile_q)
    x2d = x.reshape(S, F).astype(bf)
    if S_pad != S:
        x2d = jnp.pad(x2d, ((0, S_pad - S), (0, 0)))

    # ---- pass 1: fused QKV projection, head-major outputs ----
    tile_s = 512 if S_pad % 512 == 0 else tile_q
    vmem_p1 = _vmem_limit(2 * (tile_s * F + F * 3 * F + 3 * tile_s * F) * 2 + (8 << 20))
    qkv_shape = jax.ShapeDtypeStruct((NUM_HEAD, S_pad, d_k), bf)
    q, k, v = pl.pallas_call(
        qkv_proj_kernel,
        out_shape=(qkv_shape, qkv_shape, qkv_shape),
        grid_spec=pltpu.PrefetchScalarGridSpec(
            num_scalar_prefetch=0,
            grid=(S_pad // tile_s,),
            in_specs=[pl.BlockSpec((tile_s, F), lambda i: (i, 0)),
                      pl.BlockSpec((F, 3 * F), lambda i: (0, 0))],
            out_specs=[pl.BlockSpec((NUM_HEAD, tile_s, d_k), lambda i: (0, i, 0))] * 3),
        compiler_params=pltpu.CompilerParams(
            dimension_semantics=("parallel",),
            vmem_limit_bytes=vmem_p1),
    )(x2d, fused["wqkv"])

    # ---- pass 2: resident-KV flash attention + rest of the head ----
    kv_chunk = 512 if S_pad % 512 == 0 else tile_q

    resident = 2 * S_pad * F * 2                                   # K + V bf16
    per_tile = 2 * tile_q * F * 2 + tile_q * HEAD_PAD * 4          # q/x tiles + out tile
    weights = (F * F + F * H + H * HEAD_PAD) * 2 + (2 * F + 3 * H + HEAD_PAD) * 4
    transient = 3 * tile_q * kv_chunk * 4 + 4 * tile_q * F * 4     # scores / epilogue temps
    vmem_p2 = _vmem_limit(2 * (resident + per_tile + weights) + transient + (8 << 20))

    flops = (4 * S_pad * S_pad * F       # per-head q.k^T and p@v
             + 2 * S_pad * F * F         # attention fc
             + 2 * S_pad * F * H         # fc1
             + 2 * S_pad * H * HEAD_PAD)  # fused heads
    transcendentals = S_pad * S_pad * NUM_HEAD + 2 * S_pad * HEAD_PAD
    bytes_accessed = (4 * S_pad * F) * 2 + weights + S_pad * HEAD_PAD * 4
    cost = pl.CostEstimate(flops=int(flops), transcendentals=int(transcendentals),
                           bytes_accessed=int(bytes_accessed))

    kernel = functools.partial(dsnet_af_attn_kernel, seq_len=S, kv_chunk=kv_chunk)
    out = pl.pallas_call(
        kernel,
        out_shape=jax.ShapeDtypeStruct((S_pad, HEAD_PAD), jnp.float32),
        grid_spec=pltpu.PrefetchScalarGridSpec(
            num_scalar_prefetch=0,
            grid=(S_pad // tile_q,),
            in_specs=[
                pl.BlockSpec((NUM_HEAD, tile_q, d_k), lambda qi: (0, qi, 0)),  # q (per tile)
                pl.BlockSpec((NUM_HEAD, S_pad, d_k), lambda qi: (0, 0, 0)),    # K resident
                pl.BlockSpec((NUM_HEAD, S_pad, d_k), lambda qi: (0, 0, 0)),    # V resident
                pl.BlockSpec((tile_q, F), lambda qi: (qi, 0)),                 # x (residual)
                pl.BlockSpec((F, F), lambda qi: (0, 0)),                       # wfc
                pl.BlockSpec((1, F), lambda qi: (0, 0)),                       # ln1_g
                pl.BlockSpec((1, F), lambda qi: (0, 0)),                       # ln1_b
                pl.BlockSpec((F, H), lambda qi: (0, 0)),                       # fc1_w
                pl.BlockSpec((1, H), lambda qi: (0, 0)),                       # fc1_b
                pl.BlockSpec((1, H), lambda qi: (0, 0)),                       # ln2_g
                pl.BlockSpec((1, H), lambda qi: (0, 0)),                       # ln2_b
                pl.BlockSpec((H, HEAD_PAD), lambda qi: (0, 0)),                # fused head W
                pl.BlockSpec((1, HEAD_PAD), lambda qi: (0, 0)),                # fused head b
            ],
            out_specs=pl.BlockSpec((tile_q, HEAD_PAD), lambda qi: (qi, 0))),
        compiler_params=pltpu.CompilerParams(
            dimension_semantics=("parallel",),
            vmem_limit_bytes=vmem_p2),
        cost_estimate=cost,
    )(q, k, v, x2d,
      fused["wfc"], fused["ln1_g"], fused["ln1_b"],
      fused["fc1_w"], fused["fc1_b"], fused["ln2_g"], fused["ln2_b"],
      fused["w_heads"], fused["b_heads"])

    pred_cls = out[:S, 0]
    pred_loc = out[:S, 1:3]
    pred_ctr = out[:S, 3]
    return pred_cls, pred_loc, pred_ctr


# --------------------------------------------------------------------------------------
# Pure-JAX f32 reference (for a loose correctness check)
# --------------------------------------------------------------------------------------
def reference_forward(x, p):
    _, S, F = x.shape
    xf = x.reshape(S, F)
    q, k, v = xf @ p["wq"], xf @ p["wk"], xf @ p["wv"]
    d_k = F // NUM_HEAD
    outs = []
    for h in range(NUM_HEAD):
        lo, hi = h * d_k, (h + 1) * d_k
        s = (q[:, lo:hi] @ k[:, lo:hi].T) / math.sqrt(d_k)
        a = jax.nn.softmax(s, axis=-1)
        outs.append(a @ v[:, lo:hi])
    y = jnp.concatenate(outs, axis=-1) @ p["wfc"]
    out = _layer_norm(y + xf, p["ln1_g"], p["ln1_b"])
    h1 = jnp.maximum(out @ p["fc1_w"] + p["fc1_b"], 0.0)
    h1 = _layer_norm(h1, p["ln2_g"], p["ln2_b"])
    cls = jax.nn.sigmoid(h1 @ p["wcls"] + p["bcls"]).reshape(S)
    loc = jnp.exp(h1 @ p["wloc"] + p["bloc"])
    ctr = jax.nn.sigmoid(h1 @ p["wctr"] + p["bctr"]).reshape(S)
    return cls, loc, ctr


if __name__ == "__main__":
    key = jax.random.PRNGKey(0)
    k_x, k_p = jax.random.split(key)

    seq_len, num_feature, num_hidden = 8, 32, 32
    x = jax.random.normal(k_x, (1, seq_len, num_feature), jnp.float32)
    params = init_params(k_p, num_feature, num_hidden)
    fused = fuse_params(params)

    pred_cls, pred_loc, pred_ctr = dsnet_af_forward(x, fused)
    jax.block_until_ready((pred_cls, pred_loc, pred_ctr))

    assert pred_cls.shape == (seq_len,)
    assert pred_loc.shape == (seq_len, 2)
    assert pred_ctr.shape == (seq_len,)

    ref_cls, ref_loc, ref_ctr = reference_forward(x, params)
    assert bool(jnp.all(jnp.isfinite(pred_cls)))
    assert bool(jnp.allclose(pred_cls, ref_cls, atol=0.1, rtol=0.1))
    assert bool(jnp.allclose(pred_loc, ref_loc, atol=0.1, rtol=0.1))
    assert bool(jnp.allclose(pred_ctr, ref_ctr, atol=0.1, rtol=0.1))
    print("KERNEL_OK")
</pallas_src>

<mosaic_0001>
module attributes {stable_mosaic.version = 11 : i64} {
  func.func @qkv_proj_kernel(%arg0: i32, %arg1: memref<8x32xbf16, #tpu.memory_space<vmem>>, %arg2: memref<32x96xbf16, #tpu.memory_space<vmem>>, %arg3: memref<4x8x8xbf16, #tpu.memory_space<vmem>>, %arg4: memref<4x8x8xbf16, #tpu.memory_space<vmem>>, %arg5: memref<4x8x8xbf16, #tpu.memory_space<vmem>>) attributes {dimension_semantics = [#tpu.dimension_semantics<parallel>], iteration_bounds = array<i64: 1>, scalar_prefetch = 0 : i64, scratch_operands = 0 : i64, tpu.core_type = #tpu.core_type<tc>, window_params = [{transform_indices = @transform_0, window_bounds = array<i64: 8, 32>}, {pipeline_mode = #tpu.pipeline_mode<synchronous>, transform_indices = @transform_1, window_bounds = array<i64: 32, 96>}, {transform_indices = @transform_2, window_bounds = array<i64: 4, 8, 8>}, {transform_indices = @transform_3, window_bounds = array<i64: 4, 8, 8>}, {transform_indices = @transform_4, window_bounds = array<i64: 4, 8, 8>}]} {
    %c0 = arith.constant 0 : index
    %c0_0 = arith.constant 0 : index
    %0 = vector.load %arg1[%c0, %c0_0] : memref<8x32xbf16, #tpu.memory_space<vmem>>, vector<8x32xbf16>
    %c0_1 = arith.constant 0 : index
    %c0_2 = arith.constant 0 : index
    %1 = vector.load %arg2[%c0_1, %c0_2] : memref<32x96xbf16, #tpu.memory_space<vmem>>, vector<32x96xbf16>
    %cst = arith.constant dense<0.000000e+00> : vector<8x96xf32>
    %2 = tpu.matmul %0, %1, %cst {dimension_numbers = #tpu.dot_dimension_numbers<[1], [0], [0], [1], [0, 0, 1, 1], [], []>} : vector<8x32xbf16>, vector<32x96xbf16>, vector<8x96xf32> -> vector<8x96xf32>
    %3 = vector.extract_strided_slice %2 {offsets = [0, 0], sizes = [8, 8], strides = [1, 1]} : vector<8x96xf32> to vector<8x8xf32>
    %4 = arith.truncf %3 : vector<8x8xf32> to vector<8x8xbf16>
    %c0_3 = arith.constant 0 : index
    %c0_4 = arith.constant 0 : index
    %c0_5 = arith.constant 0 : index
    %5 = vector.load %arg3[%c0_3, %c0_4, %c0_5] : memref<4x8x8xbf16, #tpu.memory_space<vmem>>, vector<1x8x8xbf16>
    %6 = vector.shape_cast %5 : vector<1x8x8xbf16> to vector<8x8xbf16>
    %7 = vector.shape_cast %4 : vector<8x8xbf16> to vector<1x8x8xbf16>
    tpu.vector_store %arg3[%c0_3, %c0_4, %c0_5], %7 {strides = array<i32>} : memref<4x8x8xbf16, #tpu.memory_space<vmem>>, vector<1x8x8xbf16>,
    %8 = vector.extract_strided_slice %2 {offsets = [0, 32], sizes = [8, 8], strides = [1, 1]} : vector<8x96xf32> to vector<8x8xf32>
    %9 = arith.truncf %8 : vector<8x8xf32> to vector<8x8xbf16>
    %c0_6 = arith.constant 0 : index
    %c0_7 = arith.constant 0 : index
    %c0_8 = arith.constant 0 : index
    %10 = vector.load %arg4[%c0_6, %c0_7, %c0_8] : memref<4x8x8xbf16, #tpu.memory_space<vmem>>, vector<1x8x8xbf16>
    %11 = vector.shape_cast %10 : vector<1x8x8xbf16> to vector<8x8xbf16>
    %12 = vector.shape_cast %9 : vector<8x8xbf16> to vector<1x8x8xbf16>
    tpu.vector_store %arg4[%c0_6, %c0_7, %c0_8], %12 {strides = array<i32>} : memref<4x8x8xbf16, #tpu.memory_space<vmem>>, vector<1x8x8xbf16>,
    %13 = vector.extract_strided_slice %2 {offsets = [0, 64], sizes = [8, 8], strides = [1, 1]} : vector<8x96xf32> to vector<8x8xf32>
    %14 = arith.truncf %13 : vector<8x8xf32> to vector<8x8xbf16>
    %c0_9 = arith.constant 0 : index
    %c0_10 = arith.constant 0 : index
    %c0_11 = arith.constant 0 : index
    %15 = vector.load %arg5[%c0_9, %c0_10, %c0_11] : memref<4x8x8xbf16, #tpu.memory_space<vmem>>, vector<1x8x8xbf16>
    %16 = vector.shape_cast %15 : vector<1x8x8xbf16> to vector<8x8xbf16>
    %17 = vector.shape_cast %14 : vector<8x8xbf16> to vector<1x8x8xbf16>
    tpu.vector_store %arg5[%c0_9, %c0_10, %c0_11], %17 {strides = array<i32>} : memref<4x8x8xbf16, #tpu.memory_space<vmem>>, vector<1x8x8xbf16>,
    %18 = vector.extract_strided_slice %2 {offsets = [0, 8], sizes = [8, 8], strides = [1, 1]} : vector<8x96xf32> to vector<8x8xf32>
    %19 = arith.truncf %18 : vector<8x8xf32> to vector<8x8xbf16>
    %c1 = arith.constant 1 : index
    %c0_12 = arith.constant 0 : index
    %c0_13 = arith.constant 0 : index
    %20 = vector.load %arg3[%c1, %c0_12, %c0_13] : memref<4x8x8xbf16, #tpu.memory_space<vmem>>, vector<1x8x8xbf16>
    %21 = vector.shape_cast %20 : vector<1x8x8xbf16> to vector<8x8xbf16>
    %22 = vector.shape_cast %19 : vector<8x8xbf16> to vector<1x8x8xbf16>
    tpu.vector_store %arg3[%c1, %c0_12, %c0_13], %22 {strides = array<i32>} : memref<4x8x8xbf16, #tpu.memory_space<vmem>>, vector<1x8x8xbf16>,
    %23 = vector.extract_strided_slice %2 {offsets = [0, 40], sizes = [8, 8], strides = [1, 1]} : vector<8x96xf32> to vector<8x8xf32>
    %24 = arith.truncf %23 : vector<8x8xf32> to vector<8x8xbf16>
    %c1_14 = arith.constant 1 : index
    %c0_15 = arith.constant 0 : index
    %c0_16 = arith.constant 0 : index
    %25 = vector.load %arg4[%c1_14, %c0_15, %c0_16] : memref<4x8x8xbf16, #tpu.memory_space<vmem>>, vector<1x8x8xbf16>
    %26 = vector.shape_cast %25 : vector<1x8x8xbf16> to vector<8x8xbf16>
    %27 = vector.shape_cast %24 : vector<8x8xbf16> to vector<1x8x8xbf16>
    tpu.vector_store %arg4[%c1_14, %c0_15, %c0_16], %27 {strides = array<i32>} : memref<4x8x8xbf16, #tpu.memory_space<vmem>>, vector<1x8x8xbf16>,
    %28 = vector.extract_strided_slice %2 {offsets = [0, 72], sizes = [8, 8], strides = [1, 1]} : vector<8x96xf32> to vector<8x8xf32>
    %29 = arith.truncf %28 : vector<8x8xf32> to vector<8x8xbf16>
    %c1_17 = arith.constant 1 : index
    %c0_18 = arith.constant 0 : index
    %c0_19 = arith.constant 0 : index
    %30 = vector.load %arg5[%c1_17, %c0_18, %c0_19] : memref<4x8x8xbf16, #tpu.memory_space<vmem>>, vector<1x8x8xbf16>
    %31 = vector.shape_cast %30 : vector<1x8x8xbf16> to vector<8x8xbf16>
    %32 = vector.shape_cast %29 : vector<8x8xbf16> to vector<1x8x8xbf16>
    tpu.vector_store %arg5[%c1_17, %c0_18, %c0_19], %32 {strides = array<i32>} : memref<4x8x8xbf16, #tpu.memory_space<vmem>>, vector<1x8x8xbf16>,
    %33 = vector.extract_strided_slice %2 {offsets = [0, 16], sizes = [8, 8], strides = [1, 1]} : vector<8x96xf32> to vector<8x8xf32>
    %34 = arith.truncf %33 : vector<8x8xf32> to vector<8x8xbf16>
    %c2 = arith.constant 2 : index
    %c0_20 = arith.constant 0 : index
    %c0_21 = arith.constant 0 : index
    %35 = vector.load %arg3[%c2, %c0_20, %c0_21] : memref<4x8x8xbf16, #tpu.memory_space<vmem>>, vector<1x8x8xbf16>
    %36 = vector.shape_cast %35 : vector<1x8x8xbf16> to vector<8x8xbf16>
    %37 = vector.shape_cast %34 : vector<8x8xbf16> to vector<1x8x8xbf16>
    tpu.vector_store %arg3[%c2, %c0_20, %c0_21], %37 {strides = array<i32>} : memref<4x8x8xbf16, #tpu.memory_space<vmem>>, vector<1x8x8xbf16>,
    %38 = vector.extract_strided_slice %2 {offsets = [0, 48], sizes = [8, 8], strides = [1, 1]} : vector<8x96xf32> to vector<8x8xf32>
    %39 = arith.truncf %38 : vector<8x8xf32> to vector<8x8xbf16>
    %c2_22 = arith.constant 2 : index
    %c0_23 = arith.constant 0 : index
    %c0_24 = arith.constant 0 : index
    %40 = vector.load %arg4[%c2_22, %c0_23, %c0_24] : memref<4x8x8xbf16, #tpu.memory_space<vmem>>, vector<1x8x8xbf16>
    %41 = vector.shape_cast %40 : vector<1x8x8xbf16> to vector<8x8xbf16>
    %42 = vector.shape_cast %39 : vector<8x8xbf16> to vector<1x8x8xbf16>
    tpu.vector_store %arg4[%c2_22, %c0_23, %c0_24], %42 {strides = array<i32>} : memref<4x8x8xbf16, #tpu.memory_space<vmem>>, vector<1x8x8xbf16>,
    %43 = vector.extract_strided_slice %2 {offsets = [0, 80], sizes = [8, 8], strides = [1, 1]} : vector<8x96xf32> to vector<8x8xf32>
    %44 = arith.truncf %43 : vector<8x8xf32> to vector<8x8xbf16>
    %c2_25 = arith.constant 2 : index
    %c0_26 = arith.constant 0 : index
    %c0_27 = arith.constant 0 : index
    %45 = vector.load %arg5[%c2_25, %c0_26, %c0_27] : memref<4x8x8xbf16, #tpu.memory_space<vmem>>, vector<1x8x8xbf16>
    %46 = vector.shape_cast %45 : vector<1x8x8xbf16> to vector<8x8xbf16>
    %47 = vector.shape_cast %44 : vector<8x8xbf16> to vector<1x8x8xbf16>
    tpu.vector_store %arg5[%c2_25, %c0_26, %c0_27], %47 {strides = array<i32>} : memref<4x8x8xbf16, #tpu.memory_space<vmem>>, vector<1x8x8xbf16>,
    %48 = vector.extract_strided_slice %2 {offsets = [0, 24], sizes = [8, 8], strides = [1, 1]} : vector<8x96xf32> to vector<8x8xf32>
    %49 = arith.truncf %48 : vector<8x8xf32> to vector<8x8xbf16>
    %c3 = arith.constant 3 : index
    %c0_28 = arith.constant 0 : index
    %c0_29 = arith.constant 0 : index
    %50 = vector.load %arg3[%c3, %c0_28, %c0_29] : memref<4x8x8xbf16, #tpu.memory_space<vmem>>, vector<1x8x8xbf16>
    %51 = vector.shape_cast %50 : vector<1x8x8xbf16> to vector<8x8xbf16>
    %52 = vector.shape_cast %49 : vector<8x8xbf16> to vector<1x8x8xbf16>
    tpu.vector_store %arg3[%c3, %c0_28, %c0_29], %52 {strides = array<i32>} : memref<4x8x8xbf16, #tpu.memory_space<vmem>>, vector<1x8x8xbf16>,
    %53 = vector.extract_strided_slice %2 {offsets = [0, 56], sizes = [8, 8], strides = [1, 1]} : vector<8x96xf32> to vector<8x8xf32>
    %54 = arith.truncf %53 : vector<8x8xf32> to vector<8x8xbf16>
    %c3_30 = arith.constant 3 : index
    %c0_31 = arith.constant 0 : index
    %c0_32 = arith.constant 0 : index
    %55 = vector.load %arg4[%c3_30, %c0_31, %c0_32] : memref<4x8x8xbf16, #tpu.memory_space<vmem>>, vector<1x8x8xbf16>
    %56 = vector.shape_cast %55 : vector<1x8x8xbf16> to vector<8x8xbf16>
    %57 = vector.shape_cast %54 : vector<8x8xbf16> to vector<1x8x8xbf16>
    tpu.vector_store %arg4[%c3_30, %c0_31, %c0_32], %57 {strides = array<i32>} : memref<4x8x8xbf16, #tpu.memory_space<vmem>>, vector<1x8x8xbf16>,
    %58 = vector.extract_strided_slice %2 {offsets = [0, 88], sizes = [8, 8], strides = [1, 1]} : vector<8x96xf32> to vector<8x8xf32>
    %59 = arith.truncf %58 : vector<8x8xf32> to vector<8x8xbf16>
    %c3_33 = arith.constant 3 : index
    %c0_34 = arith.constant 0 : index
    %c0_35 = arith.constant 0 : index
    %60 = vector.load %arg5[%c3_33, %c0_34, %c0_35] : memref<4x8x8xbf16, #tpu.memory_space<vmem>>, vector<1x8x8xbf16>
    %61 = vector.shape_cast %60 : vector<1x8x8xbf16> to vector<8x8xbf16>
    %62 = vector.shape_cast %59 : vector<8x8xbf16> to vector<1x8x8xbf16>
    tpu.vector_store %arg5[%c3_33, %c0_34, %c0_35], %62 {strides = array<i32>} : memref<4x8x8xbf16, #tpu.memory_space<vmem>>, vector<1x8x8xbf16>,
    return
  }
  func.func @transform_0(%arg0: i32) -> (i32, i32) {
    %c0_i32 = arith.constant 0 : i32
    %c0_i32_0 = arith.constant 0 : i32
    return %arg0, %c0_i32 : i32, i32
  }
  func.func @transform_1(%arg0: i32) -> (i32, i32) {
    %c0_i32 = arith.constant 0 : i32
    %c0_i32_0 = arith.constant 0 : i32
    %c0_i32_1 = arith.constant 0 : i32
    return %c0_i32, %c0_i32_0 : i32, i32
  }
  func.func @transform_2(%arg0: i32) -> (i32, i32, i32) {
    %c0_i32 = arith.constant 0 : i32
    %c0_i32_0 = arith.constant 0 : i32
    %c0_i32_1 = arith.constant 0 : i32
    return %c0_i32, %arg0, %c0_i32_0 : i32, i32, i32
  }
  func.func @transform_3(%arg0: i32) -> (i32, i32, i32) {
    %c0_i32 = arith.constant 0 : i32
    %c0_i32_0 = arith.constant 0 : i32
    %c0_i32_1 = arith.constant 0 : i32
    return %c0_i32, %arg0, %c0_i32_0 : i32, i32, i32
  }
  func.func @transform_4(%arg0: i32) -> (i32, i32, i32) {
    %c0_i32 = arith.constant 0 : i32
    %c0_i32_0 = arith.constant 0 : i32
    %c0_i32_1 = arith.constant 0 : i32
    return %c0_i32, %arg0, %c0_i32_0 : i32, i32, i32
  }
}

</mosaic_0001>

<llo_original>
// kernel: tpu_custom_call.1
$region0: #{tpu_custom_call.1}
  #allocation0 [shape = 'u32[]', space=smem, size = 0x4, offset = 0x4, fixed_abs, tag = 'smem constant byte address 0x4 - core index']
  #allocation1 [shape = 'u32[144,128]{1,0:T(1,128)}', space=vmem, size = 0x12000, scoped, tag = 'internal scratch']
  %s0 = inlined_call_operand.hbm [shape: bf16[8,32], index: 0, kind: input, shape index: {}]
  %s1 = inlined_call_operand.hbm [shape: bf16[32,96], index: 1, kind: input, shape index: {}]
  %s2 = inlined_call_operand.hbm [shape: bf16[4,8,8], index: 2, kind: output, shape index: {0}]
  %s3 = inlined_call_operand.hbm [shape: bf16[4,8,8], index: 3, kind: output, shape index: {1}]
  %s4 = inlined_call_operand.hbm [shape: bf16[4,8,8], index: 4, kind: output, shape index: {2}]
  %5 = xla_tuple %s2, %s3, %s4
  %s6 = sld [smem:[#allocation0]]
  $region42: #{tpu_custom_call.1} parent=0
    _
  %s8 = ssub.s32 1, %s6
  %s9 = scalar_select 0, %s8, %s6
  $region1: #{tpu_custom_call.1} parent=0
    #allocation2 [shape = 'u8[2048]{0}', space=vmem, size = 0x800, scoped, tag = 'input window, operand 0, single buffered']
    #allocation3 [shape = 's32[1]{0}', space=sflag, size = 0x4, scoped, tag = 'scoped memory for tpu_custom_call.1']
    #allocation4 [shape = 's32[1]{0}', space=sflag, size = 0x4, scoped, tag = 'scoped memory for tpu_custom_call.1']
    #allocation5 [shape = 'u8[8192]{0}', space=vmem, size = 0x2000, scoped, tag = 'input window, operand 1, single buffered']
    #allocation6 [shape = 's32[1]{0}', space=sflag, size = 0x4, scoped, tag = 'scoped memory for tpu_custom_call.1']
    #allocation7 [shape = 'u8[8192]{0}', space=vmem, size = 0x2000, scoped, tag = 'output window, operand 0, single buffered']
    #allocation8 [shape = 'u8[8192]{0}', space=vmem, size = 0x2000, scoped, tag = 'output window, operand 1, single buffered']
    #allocation9 [shape = 's32[1]{0}', space=sflag, size = 0x4, scoped, tag = 'scoped memory for tpu_custom_call.1']
    #allocation10 [shape = 'u8[8192]{0}', space=vmem, size = 0x2000, scoped, tag = 'output window, operand 2, single buffered']
    %10 = vsyncpa [#allocation3], 0
    %11 = vsyncpa [#allocation6], 0
    %12 = vsyncpa [#allocation4], 0
    %13 = vsyncpa [#allocation9], 0
    // Predicated region
    $region2: #{tpu_custom_call.1} parent=1 // pred_check
      _
    $region3: #{tpu_custom_call.1} parent=1 // pred_check_branch
      %15 = sbr.rel (0) target = $region5
    $region4: #{tpu_custom_call.1} parent=1 // pred_region
      %s17 = ssub.s32 64, 64
      %18 = vsyncadd [#allocation3], %s17
      %s20 = sshll.u32 [#allocation2], 4
      %s21 = int_to_ptr.vmem [resolvable:$true] %s20
      %23 = dma.hbm_to_vmem [thread:$0]  %s0, 64, %s21, [#allocation3]
    $region5: #{tpu_custom_call.1} parent=1 // pred_fallthru
      _
    // Predicated region
    $region6: #{tpu_custom_call.1} parent=1 // pred_check
      _
    $region7: #{tpu_custom_call.1} parent=1 // pred_check_branch
      %25 = sbr.rel (0) target = $region9
    $region8: #{tpu_custom_call.1} parent=1 // pred_region
      %s27 = ssub.s32 256, 256
      %28 = vsyncadd [#allocation6], %s27
      %s29 = sshll.u32 [#allocation5], 4
      %s30 = int_to_ptr.vmem [resolvable:$true] %s29
      %35 = dma.hbm_to_vmem [thread:$0]  %s1, 256, %s30, [#allocation6], 64, 64, 4
    $region9: #{tpu_custom_call.1} parent=1 // pred_fallthru
      _
    // Predicated region
    $region10: #{tpu_custom_call.1} parent=1 // pred_check
      _
    $region11: #{tpu_custom_call.1} parent=1 // pred_check_branch
      %37 = sbr.rel (0) target = $region13
    $region12: #{tpu_custom_call.1} parent=1 // pred_region
      %38 = dma.done [#allocation3], 64
    $region13: #{tpu_custom_call.1} parent=1 // pred_fallthru
      _
    // Predicated region
    $region14: #{tpu_custom_call.1} parent=1 // pred_check
      _
    $region15: #{tpu_custom_call.1} parent=1 // pred_check_branch
      %40 = sbr.rel (0) target = $region17
    $region16: #{tpu_custom_call.1} parent=1 // pred_region
      %41 = dma.done [#allocation6], 256
    $region17: #{tpu_custom_call.1} parent=1 // pred_fallthru
      _
    %v43 = vld [vmem:[#allocation2] sm:$0xf]
    %v44 = vld [vmem:[#allocation5] sm:$0xf]
    %v45 = vld [vmem:[#allocation5 + $0x4] sm:$0xf]
    %v46 = vld [vmem:[#allocation5 + $0x8] sm:$0xf]
    %v47 = vld [vmem:[#allocation5 + $0xc] sm:$0xf]
    %v52 = vunpack.c.l.b16 %v44
    %v53 = vunpack.c.l.b16 %v45
    %v54 = vunpack.c.l.b16 %v46
    %v55 = vunpack.c.l.b16 %v47
    %v56 = vpack.c.b16 %v53, %v52
    %v57 = vpack.c.b16 %v55, %v54
    %vm60 = vcmask 261120
    %v62 = vsel %vm60, %v43, 0
    %64 = vmatprep.subr.bf16.mxu0 0
    %65 = vmatpush1.bf16.msra.mxu0 0
    %66 = vmatprep.subr.bf16.mxu0 0
    %67 = vmatpush1.bf16.msra.mxu0 0
    %68 = vmatprep.subr.bf16.mxu0 0
    %69 = vmatpush1.bf16.msra.mxu0 0
    %70 = vmatprep.subr.bf16.mxu0 0
    %71 = vmatpush1.bf16.msra.mxu0 0
    %72 = vmatprep.subr.bf16.mxu0 0
    %73 = vmatpush1.bf16.msra.mxu0 0
    %74 = vmatprep.subr.bf16.mxu0 0
    %75 = vmatpush1.bf16.msra.mxu0 0
    %76 = vmatprep.subr.bf16.mxu0 0
    %77 = vmatpush1.bf16.msra.mxu0 %v57
    %78 = vmatprep.subr.bf16.mxu0 0
    %79 = vmatpush1.bf16.msra.mxu0 %v56
    %80 = vmatprep.subr.bf16.mxu0 0
    %81 = vmatpush2.bf16.msra.mxu0 0
    %82 = vmatprep.subr.bf16.mxu0 0
    %83 = vmatpush2.bf16.msra.mxu0 0
    %84 = vmatprep.subr.bf16.mxu0 0
    %85 = vmatpush2.bf16.msra.mxu0 0
    %86 = vmatprep.subr.bf16.mxu0 0
    %87 = vmatpush2.bf16.msra.mxu0 0
    %88 = vmatprep.subr.bf16.mxu0 0
    %89 = vmatpush2.bf16.msra.mxu0 0
    %90 = vmatprep.subr.bf16.mxu0 0
    %91 = vmatpush2.bf16.msra.mxu0 0
    %92 = vmatprep.subr.bf16.mxu0 0
    %93 = vmatpush2.bf16.msra.mxu0 0
    %94 = vmatprep.subr.bf16.mxu0 0
    %95 = vmatpush2.bf16.msra.mxu0 0
    %96 = vmatprep.mubr.bf16.mxu0 0
    %97 = vmatmul.mubr.bf16.gmra.mxu0 %v62
    %v98 = vpop.f32.mrf.mxu0
    %v99 = vadd.f32 0.0, %v98
    %v100 = vpop.f32.mrf.mxu0
    %v101 = vpop.f32.mrf.mxu0
    %v102 = vpop.f32.mrf.mxu0
    %103 = vdwg.mxu0
    %v104 = vpack.c.bf16 %v99, %v99
    %vm105 = vcmask 60416
    %106 = vst.msk [vmem:[#allocation7] sm:$0xf] %vm105, %v104
    %v108 = vunpack.c.l.b16 %v104
    %v109 = vpack.c.b16 %v108, %v108
    %110 = vrot.lane.b32.xlu0 %v109, 96
    %v111 = vpop.permute.xlu0 %110
    %113 = vst.msk [vmem:[#allocation8] sm:$0xf] %vm105, %v111
    %114 = vrot.lane.b32.xlu0 %v109, 64
    %v115 = vpop.permute.xlu0 %114
    %117 = vst.msk [vmem:[#allocation10] sm:$0xf] %vm105, %v115
    %118 = vrot.lane.b32.xlu0 %v109, 120
    %v119 = vpop.permute.xlu0 %118
    %s121 = scalar_lea.vmem [#allocation7], 4
    %122 = vst.msk [vmem:[%s121] sm:$0xf] %vm105, %v119
    %123 = vrot.lane.b32.xlu0 %v109, 88
    %v124 = vpop.permute.xlu0 %123
    %s126 = scalar_lea.vmem [#allocation8], 4
    %127 = vst.msk [vmem:[%s126] sm:$0xf] %vm105, %v124
    %128 = vrot.lane.b32.xlu0 %v109, 56
    %v129 = vpop.permute.xlu0 %128
    %s131 = scalar_lea.vmem [#allocation10], 4
    %132 = vst.msk [vmem:[%s131] sm:$0xf] %vm105, %v129
    %133 = vrot.lane.b32.xlu0 %v109, 112
    %v134 = vpop.permute.xlu0 %133
    %s136 = scalar_lea.vmem [#allocation7], 8
    %137 = vst.msk [vmem:[%s136] sm:$0xf] %vm105, %v134
    %138 = vrot.lane.b32.xlu0 %v109, 80
    %v139 = vpop.permute.xlu0 %138
    %s141 = scalar_lea.vmem [#allocation8], 8
    %142 = vst.msk [vmem:[%s141] sm:$0xf] %vm105, %v139
    %143 = vrot.lane.b32.xlu0 %v109, 48
    %v144 = vpop.permute.xlu0 %143
    %s146 = scalar_lea.vmem [#allocation10], 8
    %147 = vst.msk [vmem:[%s146] sm:$0xf] %vm105, %v144
    %148 = vrot.lane.b32.xlu0 %v109, 104
    %v149 = vpop.permute.xlu0 %148
    %s151 = scalar_lea.vmem [#allocation7], 12
    %152 = vst.msk [vmem:[%s151] sm:$0xf] %vm105, %v149
    %153 = vrot.lane.b32.xlu0 %v109, 72
    %v154 = vpop.permute.xlu0 %153
    %s156 = scalar_lea.vmem [#allocation8], 12
    %157 = vst.msk [vmem:[%s156] sm:$0xf] %vm105, %v154
    %158 = vrot.lane.b32.xlu0 %v109, 40
    %v159 = vpop.permute.xlu0 %158
    %s161 = scalar_lea.vmem [#allocation10], 12
    %162 = vst.msk [vmem:[%s161] sm:$0xf] %vm105, %v159
    // Predicated region
    $region18: #{tpu_custom_call.1} parent=1 // pred_check
      _
    $region19: #{tpu_custom_call.1} parent=1 // pred_check_branch
      %164 = sbr.rel (0) target = $region21
    $region20: #{tpu_custom_call.1} parent=1 // pred_region
      %s166 = ssub.s32 256, 256
      %167 = vsyncadd [#allocation4], %s166
      %s168 = sshll.u32 [#allocation7], 4
      %s169 = int_to_ptr.vmem [resolvable:$true] %s168
      %174 = dma.vmem_to_hbm [thread:$0]  %s169, 256, %s2, [#allocation4], 64, 64, 4
    $region21: #{tpu_custom_call.1} parent=1 // pred_fallthru
      _
    // Predicated region
    $region22: #{tpu_custom_call.1} parent=1 // pred_check
      _
    $region23: #{tpu_custom_call.1} parent=1 // pred_check_branch
      %176 = sbr.rel (0) target = $region25
    $region24: #{tpu_custom_call.1} parent=1 // pred_region
      %s178 = ssub.s32 256, 256
      %179 = vsyncadd [#allocation9], %s178
      %s180 = sshll.u32 [#allocation8], 4
      %s181 = int_to_ptr.vmem [resolvable:$true] %s180
      %186 = dma.vmem_to_hbm [thread:$0]  %s181, 256, %s3, [#allocation9], 64, 64, 4
    $region25: #{tpu_custom_call.1} parent=1 // pred_fallthru
      _
    // Predicated region
    $region26: #{tpu_custom_call.1} parent=1 // pred_check
      _
    $region27: #{tpu_custom_call.1} parent=1 // pred_check_branch
      %188 = sbr.rel (0) target = $region29
    $region28: #{tpu_custom_call.1} parent=1 // pred_region
      %s190 = ssub.s32 256, 256
      %191 = vsyncadd [#allocation9], %s190
      %s192 = sshll.u32 [#allocation10], 4
      %s193 = int_to_ptr.vmem [resolvable:$true] %s192
      %198 = dma.vmem_to_hbm [thread:$0]  %s193, 256, %s4, [#allocation9], 64, 64, 4
    $region29: #{tpu_custom_call.1} parent=1 // pred_fallthru
      _
    // Predicated region
    $region30: #{tpu_custom_call.1} parent=1 // pred_check
      _
    $region31: #{tpu_custom_call.1} parent=1 // pred_check_branch
      %200 = sbr.rel (0) target = $region33
    $region32: #{tpu_custom_call.1} parent=1 // pred_region
      %201 = dma.done [#allocation4], 256
    $region33: #{tpu_custom_call.1} parent=1 // pred_fallthru
      _
    // Predicated region
    $region34: #{tpu_custom_call.1} parent=1 // pred_check
      _
    $region35: #{tpu_custom_call.1} parent=1 // pred_check_branch
      %203 = sbr.rel (0) target = $region37
    $region36: #{tpu_custom_call.1} parent=1 // pred_region
      %204 = dma.done [#allocation9], 256
    $region37: #{tpu_custom_call.1} parent=1 // pred_fallthru
      _
    // Predicated region
    $region38: #{tpu_custom_call.1} parent=1 // pred_check
      _
    $region39: #{tpu_custom_call.1} parent=1 // pred_check_branch
      %206 = sbr.rel (0) target = $region41
    $region40: #{tpu_custom_call.1} parent=1 // pred_region
      %207 = dma.done [#allocation9], 256
    $region41: #{tpu_custom_call.1} parent=1 // pred_fallthru
      _
    %208 = vsyncpa [#allocation3], 1
    %209 = vsyncpa [#allocation6], 1
    %210 = vsyncpa [#allocation4], 1
    %211 = vsyncpa [#allocation9], 1

</llo_original>
